<compile_context>
chip_gen: v6e
topology: v6e:2x2x1
jax: 0.10.0
libtpu: 0.0.40
codegen_flags: <defaults>
</compile_context>

<pallas_src>
import functools
import math

import jax
import jax.numpy as jnp
import numpy as np
from jax.experimental import pallas as pl
from jax.experimental.pallas import tpu as pltpu

BN_EPS = 1e-5


def _round_up(x, m):
    return (x + m - 1) // m * m


def _tokenizer_kernel(xf_ref, w_ref, gamma_ref, beta_ref, out_ref, stat_ref,
                      *, tile_rows, n_valid_rows, pack, cout, eps):
    """Fused conv + training-mode BatchNorm.

    xf_ref    : (tile_rows, pack*K*K*Cin) bf16  packed im2col rows for this tile
    w_ref     : (pack*K*K*Cin, pack*Cout) bf16  block-diagonal conv weight
    gamma_ref : (1, pack*Cout) f32              BN weight, duplicated `pack` times
    beta_ref  : (1, pack*Cout) f32              BN bias,   duplicated `pack` times
    out_ref   : (rows_padded, pack*Cout) f32    VMEM-resident output slab
    stat_ref  : (8, pack*Cout) f32 scratch      rows 0/1 hold per-lane sum / sumsq
    """
    step = pl.program_id(0)

    @pl.when(step == 0)
    def _init():
        stat_ref[...] = jnp.zeros_like(stat_ref)

    # One MXU matmul per tile: (tile_rows, pack*KKC) x (pack*KKC, pack*Cout) -> f32.
    conv = jnp.dot(xf_ref[...], w_ref[...], preferred_element_type=jnp.float32)

    # Stage the un-normalized conv tile into the resident output block.
    row0 = pl.multiple_of(step * tile_rows, tile_rows)
    out_ref[pl.ds(row0, tile_rows), :] = conv

    # Accumulate per-lane first / second moments in f32 VMEM scratch.
    stat_ref[0:1, :] += jnp.sum(conv, axis=0, keepdims=True)
    stat_ref[1:2, :] += jnp.sum(conv * conv, axis=0, keepdims=True)

    @pl.when(step == pl.num_programs(0) - 1)
    def _finalize():
        s = stat_ref[0:1, :]
        q = stat_ref[1:2, :]
        # Each channel appears `pack` times along the lane axis (one copy per packed
        # conv row).  Rolling by Cout cyclically permutes the copies, so summing the
        # rolls both folds the copies AND re-broadcasts the per-channel total across
        # all pack*Cout lanes (XLU work, otherwise idle here).
        s_tot = s
        q_tot = q
        for p in range(1, pack):
            s_tot = s_tot + pltpu.roll(s, shift=p * cout, axis=1)
            q_tot = q_tot + pltpu.roll(q, shift=p * cout, axis=1)
        inv_n = jnp.float32(1.0 / n_valid_rows)
        mean = s_tot * inv_n
        # TODO(synk): E[x^2]-E[x]^2 cancels badly if a channel has |mean| >> std;
        # switch to a shifted / Welford-style second moment if tighter BN stats
        # versus the f32 PyTorch module are required.
        var = jnp.maximum(q_tot * inv_n - mean * mean, 0.0)
        scale = gamma_ref[...] * jax.lax.rsqrt(var + eps)
        bias = beta_ref[...] - mean * scale
        out_ref[...] = out_ref[...] * scale + bias


@functools.partial(jax.jit, static_argnames=("kernel_size", "stride", "padding"))
def tokenizer_forward(x_nchw, w_hwio, gamma, beta, *, kernel_size, stride, padding):
    N, Cin, H, W = x_nchw.shape
    K, S, P = kernel_size, stride, padding
    Cout = w_hwio.shape[-1]
    Ho = (H + 2 * P - K) // S + 1
    Wo = (W + 2 * P - K) // S + 1
    KKC = K * K * Cin
    n_rows = N * Ho * Wo                       # conv output rows == BN sample count

    # Pack `pack` consecutive conv rows into one matmul row so the kernel's output is
    # lane-dense (Cout=64 -> pack=2 -> 128 lanes, no masked partial stores).
    pack = 1
    if Cout < 128 and 128 % Cout == 0 and n_rows % (128 // Cout) == 0:
        pack = 128 // Cout
    lanes = pack * Cout
    KKC2 = pack * KKC

    # ---- glue: NCHW -> NHWC, pad, full KxK im2col, pack rows, cast bf16 -------------
    x_nhwc = jnp.transpose(x_nchw, (0, 2, 3, 1))
    xp = jnp.pad(x_nhwc, ((0, 0), (P, P), (P, P), (0, 0)))
    cols = []
    for kh in range(K):
        for kw in range(K):
            cols.append(xp[:, kh:kh + (Ho - 1) * S + 1:S,
                           kw:kw + (Wo - 1) * S + 1:S, :])        # (N, Ho, Wo, Cin)
    xcol = jnp.concatenate(cols, axis=-1)                          # (N, Ho, Wo, K*K*Cin)
    xf = xcol.reshape(n_rows // pack, KKC2).astype(jnp.bfloat16)   # packed matmul LHS

    # Block-diagonal weight: packed LHS row x w2 = `pack` consecutive conv rows laid
    # side by side along the lane axis.  Index order (kh, kw, ci) matches the im2col.
    w_flat = w_hwio.reshape(KKC, Cout)
    w2 = jnp.zeros((KKC2, lanes), w_flat.dtype)
    for p in range(pack):
        w2 = w2.at[p * KKC:(p + 1) * KKC, p * Cout:(p + 1) * Cout].set(w_flat)
    w2 = w2.astype(jnp.bfloat16)

    gamma2 = jnp.tile(gamma.reshape(1, Cout).astype(jnp.float32), (1, pack))
    beta2 = jnp.tile(beta.reshape(1, Cout).astype(jnp.float32), (1, pack))

    # ---- row tiling ------------------------------------------------------------------
    R2 = n_rows // pack
    TR2 = R2 if R2 <= 512 else 512            # ~1024 conv rows per grid step
    R2p = _round_up(R2, TR2)
    if R2p != R2:
        xf = jnp.pad(xf, ((0, R2p - R2), (0, 0)))  # zero rows contribute 0 to stats
    num_tiles = R2p // TR2

    # ---- VMEM budget from lane-padded block sizes -------------------------------------
    vmem_est = (
        2 * _round_up(TR2, 8) * _round_up(KKC2, 128) * 2       # LHS, double-buffered
        + 2 * _round_up(KKC2, 8) * _round_up(lanes, 128) * 2   # weight
        + 2 * 2 * 8 * _round_up(lanes, 128) * 4                # gamma, beta
        + 2 * _round_up(R2p, 8) * _round_up(lanes, 128) * 4    # resident output slab
        + 8 * _round_up(lanes, 128) * 4                        # stats scratch
    )
    if vmem_est > 48 * 1024 * 1024:
        # TODO(synk): fall back to the two-phase (conv recompute) grid for huge maps.
        raise NotImplementedError("feature map too large for fused VMEM-resident pass")
    vmem_limit = min(64 * 1024 * 1024, max(2 * vmem_est + (4 << 20), 16 * 1024 * 1024))

    kernel = functools.partial(
        _tokenizer_kernel, tile_rows=TR2, n_valid_rows=n_rows,
        pack=pack, cout=Cout, eps=BN_EPS)

    out_pk = pl.pallas_call(
        kernel,
        grid=(num_tiles,),
        out_shape=jax.ShapeDtypeStruct((R2p, lanes), jnp.float32),
        in_specs=[
            pl.BlockSpec((TR2, KKC2), lambda i: (i, 0)),
            pl.BlockSpec((KKC2, lanes), lambda i: (0, 0)),
            pl.BlockSpec((1, lanes), lambda i: (0, 0)),
            pl.BlockSpec((1, lanes), lambda i: (0, 0)),
        ],
        out_specs=pl.BlockSpec((R2p, lanes), lambda i: (0, 0)),   # VMEM-resident slab
        scratch_shapes=[pltpu.VMEM((8, lanes), jnp.float32)],
        compiler_params=pltpu.CompilerParams(
            dimension_semantics=("arbitrary",),   # output revisited / stats accumulate
            vmem_limit_bytes=vmem_limit),
        cost_estimate=pl.CostEstimate(
            flops=2 * R2p * KKC2 * lanes,
            transcendentals=0,
            bytes_accessed=xf.size * 2 + w2.size * 2 + R2p * lanes * 4),
    )(xf, w2, gamma2, beta2)

    # Unpack: each packed row holds `pack` consecutive conv rows side by side, so a
    # plain row-major reshape restores (n_rows, Cout) bit-identically.
    out = out_pk[:R2].reshape(n_rows, Cout).reshape(N, Ho * Wo, Cout)
    return out            # == flatten(2,3).transpose(-2,-1) of the conv+BN output


def tokenizer_reference(x_nchw, w_hwio, gamma, beta, *, kernel_size, stride, padding):
    """Pure-JAX (f32) reference of the same forward, for correctness checks."""
    x_nhwc = jnp.transpose(x_nchw, (0, 2, 3, 1))
    conv = jax.lax.conv_general_dilated(
        x_nhwc, w_hwio, window_strides=(stride, stride),
        padding=[(padding, padding), (padding, padding)],
        dimension_numbers=("NHWC", "HWIO", "NHWC"))
    mean = jnp.mean(conv, axis=(0, 1, 2), keepdims=True)
    var = jnp.mean((conv - mean) ** 2, axis=(0, 1, 2), keepdims=True)
    y = ((conv - mean) * jax.lax.rsqrt(var + BN_EPS)
         * gamma.reshape(1, 1, 1, -1) + beta.reshape(1, 1, 1, -1))
    N, Ho, Wo, Cout = y.shape
    return y.reshape(N, Ho * Wo, Cout)


def _run_case(N, Cin, H, W, Cout, kernel_size, stride, padding, seed):
    key = jax.random.PRNGKey(seed)
    kx, kw = jax.random.split(key)
    x = jax.random.normal(kx, (N, Cin, H, W), dtype=jnp.float32)
    # Conv weight: kaiming_normal_ (fan_in, a=0) -> std = sqrt(2 / fan_in).
    fan_in = Cin * kernel_size * kernel_size
    w = (jax.random.normal(kw, (kernel_size, kernel_size, Cin, Cout), jnp.float32)
         * math.sqrt(2.0 / fan_in))
    # BatchNorm2d default affine init: weight=1, bias=0.
    gamma = jnp.ones((1, Cout), jnp.float32)
    beta = jnp.zeros((1, Cout), jnp.float32)

    out = tokenizer_forward(x, w, gamma, beta, kernel_size=kernel_size,
                            stride=stride, padding=padding)
    out = jax.block_until_ready(out)
    Ho = (H + 2 * padding - kernel_size) // stride + 1
    Wo = (W + 2 * padding - kernel_size) // stride + 1
    assert out.shape == (N, Ho * Wo, Cout), out.shape

    ref = tokenizer_reference(x, w, gamma, beta, kernel_size=kernel_size,
                              stride=stride, padding=padding)
    # Tolerance loosened vs an all-f32 path: matmul operands are bf16 (accumulation,
    # BN stats and output in f32), per the earlier perf recommendation.
    np.testing.assert_allclose(np.asarray(out), np.asarray(ref), atol=3e-2, rtol=3e-2)


if __name__ == "__main__":
    # Module defaults: n_input_channels=4, n_output_channels=64, n_conv_layers=1,
    # conv_bias=False; CCT-style kernel_size=3, stride=1, padding=1.
    _run_case(N=2, Cin=4, H=16, W=16, Cout=64, kernel_size=3, stride=1, padding=1, seed=0)
    # Larger spatial size exercises the multi-tile grid path (row tiling + cross-step
    # stats accumulation + last-step normalization of the resident slab).
    _run_case(N=2, Cin=4, H=32, W=32, Cout=64, kernel_size=3, stride=1, padding=1, seed=0)
    print("KERNEL_OK")
</pallas_src>

<mosaic_0001>
module attributes {stable_mosaic.version = 11 : i64} {
  func.func @_tokenizer_kernel(%arg0: i32, %arg1: memref<256x72xbf16, #tpu.memory_space<vmem>>, %arg2: memref<72x128xbf16, #tpu.memory_space<vmem>>, %arg3: memref<1x128xf32, #tpu.memory_space<vmem>>, %arg4: memref<1x128xf32, #tpu.memory_space<vmem>>, %arg5: memref<256x128xf32, #tpu.memory_space<vmem>>, %arg6: memref<8x128xf32, #tpu.memory_space<vmem>>) attributes {dimension_semantics = [#tpu.dimension_semantics<arbitrary>], iteration_bounds = array<i64: 1>, scalar_prefetch = 0 : i64, scratch_operands = 1 : i64, tpu.core_type = #tpu.core_type<tc>, window_params = [{transform_indices = @transform_0, window_bounds = array<i64: 256, 72>}, {pipeline_mode = #tpu.pipeline_mode<synchronous>, transform_indices = @transform_1, window_bounds = array<i64: 72, 128>}, {pipeline_mode = #tpu.pipeline_mode<synchronous>, transform_indices = @transform_2, window_bounds = array<i64: 1, 128>}, {pipeline_mode = #tpu.pipeline_mode<synchronous>, transform_indices = @transform_3, window_bounds = array<i64: 1, 128>}, {pipeline_mode = #tpu.pipeline_mode<synchronous>, transform_indices = @transform_4, window_bounds = array<i64: 256, 128>}]} {
    %c0_i32 = arith.constant 0 : i32
    %0 = arith.cmpi eq, %arg0, %c0_i32 : i32
    %1 = arith.extui %0 : i1 to i32
    %c0_i32_0 = arith.constant 0 : i32
    %2 = arith.cmpi ne, %1, %c0_i32_0 : i32
    scf.if %2 {
      %cst_16 = arith.constant 0.000000e+00 : f32
      %24 = vector.broadcast %cst_16 : f32 to vector<8x128xf32>
      %c0_17 = arith.constant 0 : index
      %c0_18 = arith.constant 0 : index
      %25 = vector.load %arg6[%c0_17, %c0_18] : memref<8x128xf32, #tpu.memory_space<vmem>>, vector<8x128xf32>
      tpu.vector_store %arg6[%c0_17, %c0_18], %24 {strides = array<i32>} : memref<8x128xf32, #tpu.memory_space<vmem>>, vector<8x128xf32>,
    } else {
    }
    %c0 = arith.constant 0 : index
    %c0_1 = arith.constant 0 : index
    %3 = vector.load %arg1[%c0, %c0_1] : memref<256x72xbf16, #tpu.memory_space<vmem>>, vector<256x72xbf16>
    %c0_2 = arith.constant 0 : index
    %c0_3 = arith.constant 0 : index
    %4 = vector.load %arg2[%c0_2, %c0_3] : memref<72x128xbf16, #tpu.memory_space<vmem>>, vector<72x128xbf16>
    %cst = arith.constant dense<0.000000e+00> : vector<256x128xf32>
    %5 = tpu.matmul %3, %4, %cst {dimension_numbers = #tpu.dot_dimension_numbers<[1], [0], [0], [1], [0, 0, 1, 1], [], []>} : vector<256x72xbf16>, vector<72x128xbf16>, vector<256x128xf32> -> vector<256x128xf32>
    %c256_i32 = arith.constant 256 : i32
    %6 = arith.muli %arg0, %c256_i32 : i32
    %7 = tpu.assume_multiple %6, 256 : i32
    %8 = arith.index_cast %7 : i32 to index
    %c0_4 = arith.constant 0 : index
    %9 = vector.load %arg5[%8, %c0_4] : memref<256x128xf32, #tpu.memory_space<vmem>>, vector<256x128xf32>
    tpu.vector_store %arg5[%8, %c0_4], %5 {strides = array<i32>} : memref<256x128xf32, #tpu.memory_space<vmem>>, vector<256x128xf32>,
    %c0_5 = arith.constant 0 : index
    %c0_6 = arith.constant 0 : index
    %10 = vector.load %arg6[%c0_5, %c0_6] : memref<8x128xf32, #tpu.memory_space<vmem>>, vector<1x128xf32>
    %cst_7 = arith.constant dense<0.000000e+00> : vector<128xf32>
    %11 = vector.multi_reduction <add>, %5, %cst_7 [0] : vector<256x128xf32> to vector<128xf32>
    %12 = vector.shape_cast %11 : vector<128xf32> to vector<1x128xf32>
    %13 = arith.addf %10, %12 : vector<1x128xf32>
    %c0_8 = arith.constant 0 : index
    %c0_9 = arith.constant 0 : index
    %14 = vector.load %arg6[%c0_8, %c0_9] : memref<8x128xf32, #tpu.memory_space<vmem>>, vector<1x128xf32>
    tpu.vector_store %arg6[%c0_8, %c0_9], %13 {strides = array<i32>} : memref<8x128xf32, #tpu.memory_space<vmem>>, vector<1x128xf32>,
    %c1 = arith.constant 1 : index
    %c0_10 = arith.constant 0 : index
    %15 = vector.load %arg6[%c1, %c0_10] : memref<8x128xf32, #tpu.memory_space<vmem>>, vector<1x128xf32>
    %16 = arith.mulf %5, %5 : vector<256x128xf32>
    %cst_11 = arith.constant dense<0.000000e+00> : vector<128xf32>
    %17 = vector.multi_reduction <add>, %16, %cst_11 [0] : vector<256x128xf32> to vector<128xf32>
    %18 = vector.shape_cast %17 : vector<128xf32> to vector<1x128xf32>
    %19 = arith.addf %15, %18 : vector<1x128xf32>
    %c1_12 = arith.constant 1 : index
    %c0_13 = arith.constant 0 : index
    %20 = vector.load %arg6[%c1_12, %c0_13] : memref<8x128xf32, #tpu.memory_space<vmem>>, vector<1x128xf32>
    tpu.vector_store %arg6[%c1_12, %c0_13], %19 {strides = array<i32>} : memref<8x128xf32, #tpu.memory_space<vmem>>, vector<1x128xf32>,
    %c0_i32_14 = arith.constant 0 : i32
    %21 = arith.cmpi eq, %arg0, %c0_i32_14 : i32
    %22 = arith.extui %21 : i1 to i32
    %c0_i32_15 = arith.constant 0 : i32
    %23 = arith.cmpi ne, %22, %c0_i32_15 : i32
    scf.if %23 {
      %c0_16 = arith.constant 0 : index
      %c0_17 = arith.constant 0 : index
      %24 = vector.load %arg6[%c0_16, %c0_17] : memref<8x128xf32, #tpu.memory_space<vmem>>, vector<1x128xf32>
      %c1_18 = arith.constant 1 : index
      %c0_19 = arith.constant 0 : index
      %25 = vector.load %arg6[%c1_18, %c0_19] : memref<8x128xf32, #tpu.memory_space<vmem>>, vector<1x128xf32>
      %c64_i32 = arith.constant 64 : i32
      %26 = tpu.dynamic_rotate %24 by %c64_i32 dim 1 : vector<1x128xf32>, i32 -> vector<1x128xf32>
      %27 = arith.addf %24, %26 : vector<1x128xf32>
      %c64_i32_20 = arith.constant 64 : i32
      %28 = tpu.dynamic_rotate %25 by %c64_i32_20 dim 1 : vector<1x128xf32>, i32 -> vector<1x128xf32>
      %29 = arith.addf %25, %28 : vector<1x128xf32>
      %cst_21 = arith.constant 0.001953125 : f32
      %30 = vector.broadcast %cst_21 : f32 to vector<1x128xf32>
      %31 = arith.mulf %27, %30 : vector<1x128xf32>
      %cst_22 = arith.constant 0.001953125 : f32
      %32 = vector.broadcast %cst_22 : f32 to vector<1x128xf32>
      %33 = arith.mulf %29, %32 : vector<1x128xf32>
      %34 = arith.mulf %31, %31 : vector<1x128xf32>
      %35 = arith.subf %33, %34 : vector<1x128xf32>
      %cst_23 = arith.constant 0.000000e+00 : f32
      %36 = vector.broadcast %cst_23 : f32 to vector<1x128xf32>
      %37 = arith.maximumf %35, %36 : vector<1x128xf32>
      %c0_24 = arith.constant 0 : index
      %c0_25 = arith.constant 0 : index
      %38 = vector.load %arg3[%c0_24, %c0_25] : memref<1x128xf32, #tpu.memory_space<vmem>>, vector<1x128xf32>
      %cst_26 = arith.constant 9.99999974E-6 : f32
      %39 = vector.broadcast %cst_26 : f32 to vector<1x128xf32>
      %40 = arith.addf %37, %39 : vector<1x128xf32>
      %41 = math.rsqrt %40 : vector<1x128xf32>
      %42 = arith.mulf %38, %41 : vector<1x128xf32>
      %c0_27 = arith.constant 0 : index
      %c0_28 = arith.constant 0 : index
      %43 = vector.load %arg4[%c0_27, %c0_28] : memref<1x128xf32, #tpu.memory_space<vmem>>, vector<1x128xf32>
      %44 = arith.mulf %31, %42 : vector<1x128xf32>
      %45 = arith.subf %43, %44 : vector<1x128xf32>
      %c0_29 = arith.constant 0 : index
      %c0_30 = arith.constant 0 : index
      %46 = vector.load %arg5[%c0_29, %c0_30] : memref<256x128xf32, #tpu.memory_space<vmem>>, vector<256x128xf32>
      %47 = vector.broadcast %42 : vector<1x128xf32> to vector<256x128xf32>
      %48 = arith.mulf %46, %47 : vector<256x128xf32>
      %49 = vector.broadcast %45 : vector<1x128xf32> to vector<256x128xf32>
      %50 = arith.addf %48, %49 : vector<256x128xf32>
      %c0_31 = arith.constant 0 : index
      %c0_32 = arith.constant 0 : index
      %51 = vector.load %arg5[%c0_31, %c0_32] : memref<256x128xf32, #tpu.memory_space<vmem>>, vector<256x128xf32>
      tpu.vector_store %arg5[%c0_31, %c0_32], %50 {strides = array<i32>} : memref<256x128xf32, #tpu.memory_space<vmem>>, vector<256x128xf32>,
    } else {
    }
    return
  }
  func.func @transform_0(%arg0: i32) -> (i32, i32) {
    %c0_i32 = arith.constant 0 : i32
    %c0_i32_0 = arith.constant 0 : i32
    return %arg0, %c0_i32 : i32, i32
  }
  func.func @transform_1(%arg0: i32) -> (i32, i32) {
    %c0_i32 = arith.constant 0 : i32
    %c0_i32_0 = arith.constant 0 : i32
    %c0_i32_1 = arith.constant 0 : i32
    return %c0_i32, %c0_i32_0 : i32, i32
  }
  func.func @transform_2(%arg0: i32) -> (i32, i32) {
    %c0_i32 = arith.constant 0 : i32
    %c0_i32_0 = arith.constant 0 : i32
    %c0_i32_1 = arith.constant 0 : i32
    return %c0_i32, %c0_i32_0 : i32, i32
  }
  func.func @transform_3(%arg0: i32) -> (i32, i32) {
    %c0_i32 = arith.constant 0 : i32
    %c0_i32_0 = arith.constant 0 : i32
    %c0_i32_1 = arith.constant 0 : i32
    return %c0_i32, %c0_i32_0 : i32, i32
  }
  func.func @transform_4(%arg0: i32) -> (i32, i32) {
    %c0_i32 = arith.constant 0 : i32
    %c0_i32_0 = arith.constant 0 : i32
    %c0_i32_1 = arith.constant 0 : i32
    return %c0_i32, %c0_i32_0 : i32, i32
  }
}

</mosaic_0001>

<llo_original>
// kernel: tokenizer_forward.1
$region0: #{tokenizer_forward.1}
  #allocation0 [shape = 'u32[]', space=smem, size = 0x4, offset = 0x4, fixed_abs, tag = 'smem constant byte address 0x4 - core index']
  #allocation1 [shape = 'u32[144,128]{1,0:T(1,128)}', space=vmem, size = 0x12000, scoped, tag = 'internal scratch']
  #allocation2 [shape = 'f32[8,128]{1,0:T(8,128)}', space=vmem, size = 0x1000, scoped, tag = 'scratch operand']
  %s0 = inlined_call_operand.vmem [shape: bf16[256,72], index: 0, kind: input, shape index: {}]
  %s1 = inlined_call_operand.vmem [shape: bf16[72,128], index: 1, kind: input, shape index: {}]
  %s2 = inlined_call_operand.vmem [shape: f32[1,128], index: 2, kind: input, shape index: {}]
  %s3 = inlined_call_operand.vmem [shape: f32[1,128], index: 3, kind: input, shape index: {}]
  %s4 = inlined_call_operand.vmem [shape: f32[256,128], index: 4, kind: output, shape index: {}]
  %s5 = sld [smem:[#allocation0]]
  $region34: #{tokenizer_forward.1} parent=0
    _
  %s7 = ssub.s32 1, %s5
  %s8 = scalar_select 0, %s7, %s5
  // Predicated region
  $region2: #{tokenizer_forward.1} parent=0 // pred_check
    _
  $region3: #{tokenizer_forward.1} parent=0 // pred_check_branch
    %10 = sbr.rel (0) target = $region5
  $region4: #{tokenizer_forward.1} parent=0 // pred_region
    _
  $region5: #{tokenizer_forward.1} parent=0 // pred_fallthru
    _
  // Predicated region
  $region6: #{tokenizer_forward.1} parent=0 // pred_check
    _
  $region7: #{tokenizer_forward.1} parent=0 // pred_check_branch
    %12 = sbr.rel (0) target = $region9
  $region8: #{tokenizer_forward.1} parent=0 // pred_region
    _
  $region9: #{tokenizer_forward.1} parent=0 // pred_fallthru
    _
  // Predicated region
  $region10: #{tokenizer_forward.1} parent=0 // pred_check
    _
  $region11: #{tokenizer_forward.1} parent=0 // pred_check_branch
    %14 = sbr.rel (0) target = $region13
  $region12: #{tokenizer_forward.1} parent=0 // pred_region
    _
  $region13: #{tokenizer_forward.1} parent=0 // pred_fallthru
    _
  // Predicated region
  $region14: #{tokenizer_forward.1} parent=0 // pred_check
    _
  $region15: #{tokenizer_forward.1} parent=0 // pred_check_branch
    %16 = sbr.rel (0) target = $region17
  $region16: #{tokenizer_forward.1} parent=0 // pred_region
    _
  $region17: #{tokenizer_forward.1} parent=0 // pred_fallthru
    _
  %p18 = scmp.eq.s32.totalorder 0, 0
  // Predicated region
  $region18: #{tokenizer_forward.1} parent=0 // pred_check
    %p19 = pneg %p18
  $region19: #{tokenizer_forward.1} parent=0 // pred_check_branch
    %21 = sbr.rel (%p19) target = $region21
  $region20: #{tokenizer_forward.1} parent=0 // pred_region
    %22 = vst [vmem:[#allocation2] sm:$0xff] 0.0
  $region21: #{tokenizer_forward.1} parent=0 // pred_fallthru
    _
  %v23 = vld [vmem:[%s0] sm:$0xf]
  %v24 = vld [vmem:[%s0 + $0x4] sm:$0xf]
  %v25 = vld [vmem:[%s0 + $0x8] sm:$0xf]
  %v26 = vld [vmem:[%s0 + $0xc] sm:$0xf]
  %v27 = vld [vmem:[%s0 + $0x10] sm:$0xf]
  %v28 = vld [vmem:[%s0 + $0x14] sm:$0xf]
  %v29 = vld [vmem:[%s0 + $0x18] sm:$0xf]
  %v30 = vld [vmem:[%s0 + $0x1c] sm:$0xf]
  %v31 = vld [vmem:[%s0 + $0x20] sm:$0xf]
  %v32 = vld [vmem:[%s0 + $0x24] sm:$0xf]
  %v33 = vld [vmem:[%s0 + $0x28] sm:$0xf]
  %v34 = vld [vmem:[%s0 + $0x2c] sm:$0xf]
  %v35 = vld [vmem:[%s0 + $0x30] sm:$0xf]
  %v36 = vld [vmem:[%s0 + $0x34] sm:$0xf]
  %v37 = vld [vmem:[%s0 + $0x38] sm:$0xf]
  %v38 = vld [vmem:[%s0 + $0x3c] sm:$0xf]
  %v39 = vld [vmem:[%s0 + $0x40] sm:$0xf]
  %v40 = vld [vmem:[%s0 + $0x44] sm:$0xf]
  %v41 = vld [vmem:[%s0 + $0x48] sm:$0xf]
  %v42 = vld [vmem:[%s0 + $0x4c] sm:$0xf]
  %v43 = vld [vmem:[%s0 + $0x50] sm:$0xf]
  %v44 = vld [vmem:[%s0 + $0x54] sm:$0xf]
  %v45 = vld [vmem:[%s0 + $0x58] sm:$0xf]
  %v46 = vld [vmem:[%s0 + $0x5c] sm:$0xf]
  %v47 = vld [vmem:[%s0 + $0x60] sm:$0xf]
  %v48 = vld [vmem:[%s0 + $0x64] sm:$0xf]
  %v49 = vld [vmem:[%s0 + $0x68] sm:$0xf]
  %v50 = vld [vmem:[%s0 + $0x6c] sm:$0xf]
  %v51 = vld [vmem:[%s0 + $0x70] sm:$0xf]
  %v52 = vld [vmem:[%s0 + $0x74] sm:$0xf]
  %v53 = vld [vmem:[%s0 + $0x78] sm:$0xf]
  %v54 = vld [vmem:[%s0 + $0x7c] sm:$0xf]
  %v55 = vld [vmem:[%s1] sm:$0xf]
  %v56 = vld [vmem:[%s1 + $0x4] sm:$0xf]
  %v57 = vld [vmem:[%s1 + $0x8] sm:$0xf]
  %v58 = vld [vmem:[%s1 + $0xc] sm:$0xf]
  %v59 = vld [vmem:[%s1 + $0x10] sm:$0xf]
  %v60 = vld [vmem:[%s1 + $0x14] sm:$0xf]
  %v61 = vld [vmem:[%s1 + $0x18] sm:$0xf]
  %v62 = vld [vmem:[%s1 + $0x1c] sm:$0xf]
  %v63 = vld [vmem:[%s1 + $0x20] sm:$0xf]
  %v96 = vunpack.c.l.b16 %v23
  %v97 = vunpack.c.l.b16 %v24
  %v98 = vunpack.c.l.b16 %v25
  %v99 = vunpack.c.l.b16 %v26
  %v100 = vunpack.c.l.b16 %v27
  %v101 = vunpack.c.l.b16 %v28
  %v102 = vunpack.c.l.b16 %v29
  %v103 = vunpack.c.l.b16 %v30
  %v104 = vunpack.c.l.b16 %v31
  %v105 = vunpack.c.l.b16 %v32
  %v106 = vunpack.c.l.b16 %v33
  %v107 = vunpack.c.l.b16 %v34
  %v108 = vunpack.c.l.b16 %v35
  %v109 = vunpack.c.l.b16 %v36
  %v110 = vunpack.c.l.b16 %v37
  %v111 = vunpack.c.l.b16 %v38
  %v112 = vunpack.c.l.b16 %v39
  %v113 = vunpack.c.l.b16 %v40
  %v114 = vunpack.c.l.b16 %v41
  %v115 = vunpack.c.l.b16 %v42
  %v116 = vunpack.c.l.b16 %v43
  %v117 = vunpack.c.l.b16 %v44
  %v118 = vunpack.c.l.b16 %v45
  %v119 = vunpack.c.l.b16 %v46
  %v120 = vunpack.c.l.b16 %v47
  %v121 = vunpack.c.l.b16 %v48
  %v122 = vunpack.c.l.b16 %v49
  %v123 = vunpack.c.l.b16 %v50
  %v124 = vunpack.c.l.b16 %v51
  %v125 = vunpack.c.l.b16 %v52
  %v126 = vunpack.c.l.b16 %v53
  %v127 = vunpack.c.l.b16 %v54
  %v128 = vpack.c.b16 %v97, %v96
  %v129 = vpack.c.b16 %v99, %v98
  %v130 = vpack.c.b16 %v101, %v100
  %v131 = vpack.c.b16 %v103, %v102
  %v132 = vpack.c.b16 %v105, %v104
  %v133 = vpack.c.b16 %v107, %v106
  %v134 = vpack.c.b16 %v109, %v108
  %v135 = vpack.c.b16 %v111, %v110
  %v136 = vpack.c.b16 %v113, %v112
  %v137 = vpack.c.b16 %v115, %v114
  %v138 = vpack.c.b16 %v117, %v116
  %v139 = vpack.c.b16 %v119, %v118
  %v140 = vpack.c.b16 %v121, %v120
  %v141 = vpack.c.b16 %v123, %v122
  %v142 = vpack.c.b16 %v125, %v124
  %v143 = vpack.c.b16 %v127, %v126
  %v153 = vunpack.c.l.b16 %v55
  %v154 = vunpack.c.l.b16 %v56
  %v155 = vunpack.c.l.b16 %v57
  %v156 = vunpack.c.l.b16 %v58
  %v157 = vunpack.c.l.b16 %v59
  %v158 = vunpack.c.l.b16 %v60
  %v159 = vunpack.c.l.b16 %v61
  %v160 = vunpack.c.l.b16 %v62
  %v161 = vunpack.c.l.b16 %v63
  %v162 = vpack.c.b16 %v154, %v153
  %v163 = vpack.c.b16 %v156, %v155
  %v164 = vpack.c.b16 %v158, %v157
  %v165 = vpack.c.b16 %v160, %v159
  %v166 = vpack.c.b16 %v161, %v161
  %vm171 = vcmask 588800
  %v173 = vsel %vm171, %v128, 0
  %v176 = vsel %vm171, %v129, 0
  %v179 = vsel %vm171, %v130, 0
  %v182 = vsel %vm171, %v131, 0
  %v185 = vsel %vm171, %v132, 0
  %v188 = vsel %vm171, %v133, 0
  %v191 = vsel %vm171, %v134, 0
  %v194 = vsel %vm171, %v135, 0
  %v197 = vsel %vm171, %v136, 0
  %v200 = vsel %vm171, %v137, 0
  %v203 = vsel %vm171, %v138, 0
  %v206 = vsel %vm171, %v139, 0
  %v209 = vsel %vm171, %v140, 0
  %v212 = vsel %vm171, %v141, 0
  %v215 = vsel %vm171, %v142, 0
  %v218 = vsel %vm171, %v143, 0
  %vm220 = vcmask 1043456
  %v222 = vsel %vm220, %v166, 0
  %224 = vmatprep.subr.bf16.mxu0 0
  %225 = vmatpush1.bf16.msra.mxu0 0
  %226 = vmatprep.subr.bf16.mxu0 0
  %227 = vmatpush1.bf16.msra.mxu0 0
  %228 = vmatprep.subr.bf16.mxu0 0
  %229 = vmatpush1.bf16.msra.mxu0 0
  %230 = vmatprep.subr.bf16.mxu0 0
  %231 = vmatpush1.bf16.msra.mxu0 %v222
  %232 = vmatprep.subr.bf16.mxu0 0
  %233 = vmatpush1.bf16.msra.mxu0 %v165
  %234 = vmatprep.subr.bf16.mxu0 0
  %235 = vmatpush1.bf16.msra.mxu0 %v164
  %236 = vmatprep.subr.bf16.mxu0 0
  %237 = vmatpush1.bf16.msra.mxu0 %v163
  %238 = vmatprep.subr.bf16.mxu0 0
  %239 = vmatpush1.bf16.msra.mxu0 %v162
  %240 = vmatprep.subr.bf16.mxu0 0
  %241 = vmatpush2.bf16.msra.mxu0 0
  %242 = vmatprep.subr.bf16.mxu0 0
  %243 = vmatpush2.bf16.msra.mxu0 0
  %244 = vmatprep.subr.bf16.mxu0 0
  %245 = vmatpush2.bf16.msra.mxu0 0
  %246 = vmatprep.subr.bf16.mxu0 0
  %247 = vmatpush2.bf16.msra.mxu0 0
  %248 = vmatprep.subr.bf16.mxu0 0
  %249 = vmatpush2.bf16.msra.mxu0 0
  %250 = vmatprep.subr.bf16.mxu0 0
  %251 = vmatpush2.bf16.msra.mxu0 0
  %252 = vmatprep.subr.bf16.mxu0 0
  %253 = vmatpush2.bf16.msra.mxu0 0
  %254 = vmatprep.subr.bf16.mxu0 0
  %255 = vmatpush2.bf16.msra.mxu0 0
  %256 = vmatprep.mubr.bf16.mxu0 0
  %257 = vmatmul.mubr.bf16.gmra.mxu0 %v173
  %v258 = vpop.f32.mrf.mxu0
  %v259 = vadd.f32 0.0, %v258
  %v260 = vpop.f32.mrf.mxu0
  %v261 = vpop.f32.mrf.mxu0
  %v262 = vadd.f32 0.0, %v261
  %v263 = vpop.f32.mrf.mxu0
  %264 = vmatprep.mubr.bf16.mxu0 0
  %265 = vmatmul.mubr.bf16.gmra.mxu0 %v176
  %v266 = vpop.f32.mrf.mxu0
  %v267 = vadd.f32 0.0, %v266
  %v268 = vpop.f32.mrf.mxu0
  %v269 = vpop.f32.mrf.mxu0
  %v270 = vadd.f32 0.0, %v269
  %v271 = vpop.f32.mrf.mxu0
  %272 = vmatprep.mubr.bf16.mxu0 0
  %273 = vmatmul.mubr.bf16.gmra.mxu0 %v179
  %v274 = vpop.f32.mrf.mxu0
  %v275 = vadd.f32 0.0, %v274
  %v276 = vpop.f32.mrf.mxu0
  %v277 = vpop.f32.mrf.mxu0
  %v278 = vadd.f32 0.0, %v277
  %v279 = vpop.f32.mrf.mxu0
  %280 = vmatprep.mubr.bf16.mxu0 0
  %281 = vmatmul.mubr.bf16.gmra.mxu0 %v182
  %v282 = vpop.f32.mrf.mxu0
  %v283 = vadd.f32 0.0, %v282
  %v284 = vpop.f32.mrf.mxu0
  %v285 = vpop.f32.mrf.mxu0
  %v286 = vadd.f32 0.0, %v285
  %v287 = vpop.f32.mrf.mxu0
  %288 = vmatprep.mubr.bf16.mxu0 0
  %289 = vmatmul.mubr.bf16.gmra.mxu0 %v185
  %v290 = vpop.f32.mrf.mxu0
  %v291 = vadd.f32 0.0, %v290
  %v292 = vpop.f32.mrf.mxu0
  %v293 = vpop.f32.mrf.mxu0
  %v294 = vadd.f32 0.0, %v293
  %v295 = vpop.f32.mrf.mxu0
  %296 = vmatprep.mubr.bf16.mxu0 0
  %297 = vmatmul.mubr.bf16.gmra.mxu0 %v188
  %v298 = vpop.f32.mrf.mxu0
  %v299 = vadd.f32 0.0, %v298
  %v300 = vpop.f32.mrf.mxu0
  %v301 = vpop.f32.mrf.mxu0
  %v302 = vadd.f32 0.0, %v301
  %v303 = vpop.f32.mrf.mxu0
  %304 = vmatprep.mubr.bf16.mxu0 0
  %305 = vmatmul.mubr.bf16.gmra.mxu0 %v191
  %v306 = vpop.f32.mrf.mxu0
  %v307 = vadd.f32 0.0, %v306
  %v308 = vpop.f32.mrf.mxu0
  %v309 = vpop.f32.mrf.mxu0
  %v310 = vadd.f32 0.0, %v309
  %v311 = vpop.f32.mrf.mxu0
  %312 = vmatprep.mubr.bf16.mxu0 0
  %313 = vmatmul.mubr.bf16.gmra.mxu0 %v194
  %v314 = vpop.f32.mrf.mxu0
  %v315 = vadd.f32 0.0, %v314
  %v316 = vpop.f32.mrf.mxu0
  %v317 = vpop.f32.mrf.mxu0
  %v318 = vadd.f32 0.0, %v317
  %v319 = vpop.f32.mrf.mxu0
  %320 = vmatprep.mubr.bf16.mxu0 0
  %321 = vmatmul.mubr.bf16.gmra.mxu0 %v197
  %v322 = vpop.f32.mrf.mxu0
  %v323 = vadd.f32 0.0, %v322
  %v324 = vpop.f32.mrf.mxu0
  %v325 = vpop.f32.mrf.mxu0
  %v326 = vadd.f32 0.0, %v325
  %v327 = vpop.f32.mrf.mxu0
  %328 = vmatprep.mubr.bf16.mxu0 0
  %329 = vmatmul.mubr.bf16.gmra.mxu0 %v200
  %v330 = vpop.f32.mrf.mxu0
  %v331 = vadd.f32 0.0, %v330
  %v332 = vpop.f32.mrf.mxu0
  %v333 = vpop.f32.mrf.mxu0
  %v334 = vadd.f32 0.0, %v333
  %v335 = vpop.f32.mrf.mxu0
  %336 = vmatprep.mubr.bf16.mxu0 0
  %337 = vmatmul.mubr.bf16.gmra.mxu0 %v203
  %v338 = vpop.f32.mrf.mxu0
  %v339 = vadd.f32 0.0, %v338
  %v340 = vpop.f32.mrf.mxu0
  %v341 = vpop.f32.mrf.mxu0
  %v342 = vadd.f32 0.0, %v341
  %v343 = vpop.f32.mrf.mxu0
  %344 = vmatprep.mubr.bf16.mxu0 0
  %345 = vmatmul.mubr.bf16.gmra.mxu0 %v206
  %v346 = vpop.f32.mrf.mxu0
  %v347 = vadd.f32 0.0, %v346
  %v348 = vpop.f32.mrf.mxu0
  %v349 = vpop.f32.mrf.mxu0
  %v350 = vadd.f32 0.0, %v349
  %v351 = vpop.f32.mrf.mxu0
  %352 = vmatprep.mubr.bf16.mxu0 0
  %353 = vmatmul.mubr.bf16.gmra.mxu0 %v209
  %v354 = vpop.f32.mrf.mxu0
  %v355 = vadd.f32 0.0, %v354
  %v356 = vpop.f32.mrf.mxu0
  %v357 = vpop.f32.mrf.mxu0
  %v358 = vadd.f32 0.0, %v357
  %v359 = vpop.f32.mrf.mxu0
  %360 = vmatprep.mubr.bf16.mxu0 0
  %361 = vmatmul.mubr.bf16.gmra.mxu0 %v212
  %v362 = vpop.f32.mrf.mxu0
  %v363 = vadd.f32 0.0, %v362
  %v364 = vpop.f32.mrf.mxu0
  %v365 = vpop.f32.mrf.mxu0
  %v366 = vadd.f32 0.0, %v365
  %v367 = vpop.f32.mrf.mxu0
  %368 = vmatprep.mubr.bf16.mxu0 0
  %369 = vmatmul.mubr.bf16.gmra.mxu0 %v215
  %v370 = vpop.f32.mrf.mxu0
  %v371 = vadd.f32 0.0, %v370
  %v372 = vpop.f32.mrf.mxu0
  %v373 = vpop.f32.mrf.mxu0
  %v374 = vadd.f32 0.0, %v373
  %v375 = vpop.f32.mrf.mxu0
  %376 = vmatprep.mubr.bf16.mxu0 0
  %377 = vmatmul.mubr.bf16.gmra.mxu0 %v218
  %v378 = vpop.f32.mrf.mxu0
  %v379 = vadd.f32 0.0, %v378
  %v380 = vpop.f32.mrf.mxu0
  %v381 = vpop.f32.mrf.mxu0
  %v382 = vadd.f32 0.0, %v381
  %v383 = vpop.f32.mrf.mxu0
  %384 = vdwg.mxu0
  %s385 = smul.u32 0, 256
  %s386 = scalar_lea.vmem %s4, %s385
  %387 = vst [vmem:[%s386] sm:$0xff] %v259
  %388 = vst [vmem:[%s386 + $0x8] sm:$0xff] %v262
  %389 = vst [vmem:[%s386 + $0x10] sm:$0xff] %v267
  %390 = vst [vmem:[%s386 + $0x18] sm:$0xff] %v270
  %391 = vst [vmem:[%s386 + $0x20] sm:$0xff] %v275
  %392 = vst [vmem:[%s386 + $0x28] sm:$0xff] %v278
  %393 = vst [vmem:[%s386 + $0x30] sm:$0xff] %v283
  %394 = vst [vmem:[%s386 + $0x38] sm:$0xff] %v286
  %395 = vst [vmem:[%s386 + $0x40] sm:$0xff] %v291
  %396 = vst [vmem:[%s386 + $0x48] sm:$0xff] %v294
  %397 = vst [vmem:[%s386 + $0x50] sm:$0xff] %v299
  %398 = vst [vmem:[%s386 + $0x58] sm:$0xff] %v302
  %399 = vst [vmem:[%s386 + $0x60] sm:$0xff] %v307
  %400 = vst [vmem:[%s386 + $0x68] sm:$0xff] %v310
  %401 = vst [vmem:[%s386 + $0x70] sm:$0xff] %v315
  %402 = vst [vmem:[%s386 + $0x78] sm:$0xff] %v318
  %403 = vst [vmem:[%s386 + $0x80] sm:$0xff] %v323
  %404 = vst [vmem:[%s386 + $0x88] sm:$0xff] %v326
  %405 = vst [vmem:[%s386 + $0x90] sm:$0xff] %v331
  %406 = vst [vmem:[%s386 + $0x98] sm:$0xff] %v334
  %407 = vst [vmem:[%s386 + $0xa0] sm:$0xff] %v339
  %408 = vst [vmem:[%s386 + $0xa8] sm:$0xff] %v342
  %409 = vst [vmem:[%s386 + $0xb0] sm:$0xff] %v347
  %410 = vst [vmem:[%s386 + $0xb8] sm:$0xff] %v350
  %411 = vst [vmem:[%s386 + $0xc0] sm:$0xff] %v355
  %412 = vst [vmem:[%s386 + $0xc8] sm:$0xff] %v358
  %413 = vst [vmem:[%s386 + $0xd0] sm:$0xff] %v363
  %414 = vst [vmem:[%s386 + $0xd8] sm:$0xff] %v366
  %415 = vst [vmem:[%s386 + $0xe0] sm:$0xff] %v371
  %416 = vst [vmem:[%s386 + $0xe8] sm:$0xff] %v374
  %417 = vst [vmem:[%s386 + $0xf0] sm:$0xff] %v379
  %418 = vst [vmem:[%s386 + $0xf8] sm:$0xff] %v382
  %v419 = vld [vmem:[#allocation2] sm:$0x1]
  %v420 = vadd.f32 %v259, %v262
  %v421 = vadd.f32 %v420, %v267
  %v422 = vadd.f32 %v421, %v270
  %v423 = vadd.f32 %v422, %v275
  %v424 = vadd.f32 %v423, %v278
  %v425 = vadd.f32 %v424, %v283
  %v426 = vadd.f32 %v425, %v286
  %v427 = vadd.f32 %v426, %v291
  %v428 = vadd.f32 %v427, %v294
  %v429 = vadd.f32 %v428, %v299
  %v430 = vadd.f32 %v429, %v302
  %v431 = vadd.f32 %v430, %v307
  %v432 = vadd.f32 %v431, %v310
  %v433 = vadd.f32 %v432, %v315
  %v434 = vadd.f32 %v433, %v318
  %v435 = vadd.f32 %v434, %v323
  %v436 = vadd.f32 %v435, %v326
  %v437 = vadd.f32 %v436, %v331
  %v438 = vadd.f32 %v437, %v334
  %v439 = vadd.f32 %v438, %v339
  %v440 = vadd.f32 %v439, %v342
  %v441 = vadd.f32 %v440, %v347
  %v442 = vadd.f32 %v441, %v350
  %v443 = vadd.f32 %v442, %v355
  %v444 = vadd.f32 %v443, %v358
  %v445 = vadd.f32 %v444, %v363
  %v446 = vadd.f32 %v445, %v366
  %v447 = vadd.f32 %v446, %v371
  %v448 = vadd.f32 %v447, %v374
  %v449 = vadd.f32 %v448, %v379
  %v450 = vadd.f32 %v449, %v382
  %v451 = vrot.slane %v450, 4
  %v452 = vadd.f32 %v450, %v451
  %v453 = vrot.slane %v452, 2
  %v454 = vadd.f32 %v452, %v453
  %v455 = vrot.slane %v454, 1
  %v456 = vadd.f32 %v454, %v455
  %v457 = vadd.f32 %v419, %v456
  %458 = vst [vmem:[#allocation2] sm:$0x1] %v457
  %v459 = vld [vmem:[#allocation2 + $0x1] sm:$0x1]
  %v460 = vmul.f32 %v259, %v259
  %v461 = vmul.f32 %v262, %v262
  %v462 = vmul.f32 %v267, %v267
  %v463 = vmul.f32 %v270, %v270
  %v464 = vmul.f32 %v275, %v275
  %v465 = vmul.f32 %v278, %v278
  %v466 = vmul.f32 %v283, %v283
  %v467 = vmul.f32 %v286, %v286
  %v468 = vmul.f32 %v291, %v291
  %v469 = vmul.f32 %v294, %v294
  %v470 = vmul.f32 %v299, %v299
  %v471 = vmul.f32 %v302, %v302
  %v472 = vmul.f32 %v307, %v307
  %v473 = vmul.f32 %v310, %v310
  %v474 = vmul.f32 %v315, %v315
  %v475 = vmul.f32 %v318, %v318
  %v476 = vmul.f32 %v323, %v323
  %v477 = vmul.f32 %v326, %v326
  %v478 = vmul.f32 %v331, %v331
  %v479 = vmul.f32 %v334, %v334
  %v480 = vmul.f32 %v339, %v339
  %v481 = vmul.f32 %v342, %v342
  %v482 = vmul.f32 %v347, %v347
  %v483 = vmul.f32 %v350, %v350
  %v484 = vmul.f32 %v355, %v355
  %v485 = vmul.f32 %v358, %v358
  %v486 = vmul.f32 %v363, %v363
  %v487 = vmul.f32 %v366, %v366
  %v488 = vmul.f32 %v371, %v371
  %v489 = vmul.f32 %v374, %v374
  %v490 = vmul.f32 %v379, %v379
  %v491 = vmul.f32 %v382, %v382
  %v492 = vadd.f32 %v460, %v461
  %v493 = vadd.f32 %v492, %v462
  %v494 = vadd.f32 %v493, %v463
  %v495 = vadd.f32 %v494, %v464
  %v496 = vadd.f32 %v495, %v465
  %v497 = vadd.f32 %v496, %v466
  %v498 = vadd.f32 %v497, %v467
  %v499 = vadd.f32 %v498, %v468
  %v500 = vadd.f32 %v499, %v469
  %v501 = vadd.f32 %v500, %v470
  %v502 = vadd.f32 %v501, %v471
  %v503 = vadd.f32 %v502, %v472
  %v504 = vadd.f32 %v503, %v473
  %v505 = vadd.f32 %v504, %v474
  %v506 = vadd.f32 %v505, %v475
  %v507 = vadd.f32 %v506, %v476
  %v508 = vadd.f32 %v507, %v477
  %v509 = vadd.f32 %v508, %v478
  %v510 = vadd.f32 %v509, %v479
  %v511 = vadd.f32 %v510, %v480
  %v512 = vadd.f32 %v511, %v481
  %v513 = vadd.f32 %v512, %v482
  %v514 = vadd.f32 %v513, %v483
  %v515 = vadd.f32 %v514, %v484
  %v516 = vadd.f32 %v515, %v485
  %v517 = vadd.f32 %v516, %v486
  %v518 = vadd.f32 %v517, %v487
  %v519 = vadd.f32 %v518, %v488
  %v520 = vadd.f32 %v519, %v489
  %v521 = vadd.f32 %v520, %v490
  %v522 = vadd.f32 %v521, %v491
  %v523 = vrot.slane %v522, 4
  %v524 = vadd.f32 %v522, %v523
  %v525 = vrot.slane %v524, 2
  %v526 = vadd.f32 %v524, %v525
  %v527 = vrot.slane %v526, 1
  %v528 = vadd.f32 %v526, %v527
  %v529 = vadd.f32 %v459, %v528
  %530 = vst [vmem:[#allocation2 + $0x1] sm:$0x1] %v529
  // Predicated region
  $region22: #{tokenizer_forward.1} parent=0 // pred_check
    %p531 = pneg %p18
  $region23: #{tokenizer_forward.1} parent=0 // pred_check_branch
    %533 = sbr.rel (%p531) target = $region25
  $region24: #{tokenizer_forward.1} parent=0 // pred_region
    %v534 = vld [vmem:[#allocation2] sm:$0x1]
    %v535 = vld [vmem:[#allocation2 + $0x1] sm:$0x1]
    %536 = vrot.lane.b32.xlu0 %v534, 64
    %v537 = vpop.permute.xlu0 %536
    %v538 = vadd.f32 %v534, %v537
    %539 = vrot.lane.b32.xlu0 %v535, 64
    %v540 = vpop.permute.xlu0 %539
    %v541 = vadd.f32 %v535, %v540
    %v542 = vmul.f32 %v538, 0.001953125
    %v543 = vmul.f32 %v541, 0.001953125
    %v544 = vmul.f32 %v542, %v542
    %v545 = vsub.f32 %v543, %v544
    %v546 = vmax.f32 %v545, 0.0
    %v547 = vld [vmem:[%s2] sm:$0x1]
    %v548 = vadd.f32 %v546, 1e-05
    %v549 = vrsqrt.pop %v548
    %v550 = vmul.f32 %v547, %v549
    %v551 = vld [vmem:[%s3] sm:$0x1]
    %v552 = vmul.f32 %v542, %v550
    %v553 = vsub.f32 %v551, %v552
    %v554 = vld [vmem:[%s4] sm:$0xff]
    %v555 = vld [vmem:[%s4 + $0x8] sm:$0xff]
    %v556 = vld [vmem:[%s4 + $0x10] sm:$0xff]
    %v557 = vld [vmem:[%s4 + $0x18] sm:$0xff]
    %v558 = vld [vmem:[%s4 + $0x20] sm:$0xff]
    %v559 = vld [vmem:[%s4 + $0x28] sm:$0xff]
    %v560 = vld [vmem:[%s4 + $0x30] sm:$0xff]
    %v561 = vld [vmem:[%s4 + $0x38] sm:$0xff]
    %v562 = vld [vmem:[%s4 + $0x40] sm:$0xff]
    %v563 = vld [vmem:[%s4 + $0x48] sm:$0xff]
    %v564 = vld [vmem:[%s4 + $0x50] sm:$0xff]
    %v565 = vld [vmem:[%s4 + $0x58] sm:$0xff]
    %v566 = vld [vmem:[%s4 + $0x60] sm:$0xff]
    %v567 = vld [vmem:[%s4 + $0x68] sm:$0xff]
    %v568 = vld [vmem:[%s4 + $0x70] sm:$0xff]
    %v569 = vld [vmem:[%s4 + $0x78] sm:$0xff]
    %v570 = vld [vmem:[%s4 + $0x80] sm:$0xff]
    %v571 = vld [vmem:[%s4 + $0x88] sm:$0xff]
    %v572 = vld [vmem:[%s4 + $0x90] sm:$0xff]
    %v573 = vld [vmem:[%s4 + $0x98] sm:$0xff]
    %v574 = vld [vmem:[%s4 + $0xa0] sm:$0xff]
    %v575 = vld [vmem:[%s4 + $0xa8] sm:$0xff]
    %v576 = vld [vmem:[%s4 + $0xb0] sm:$0xff]
    %v577 = vld [vmem:[%s4 + $0xb8] sm:$0xff]
    %v578 = vld [vmem:[%s4 + $0xc0] sm:$0xff]
    %v579 = vld [vmem:[%s4 + $0xc8] sm:$0xff]
    %v580 = vld [vmem:[%s4 + $0xd0] sm:$0xff]
    %v581 = vld [vmem:[%s4 + $0xd8] sm:$0xff]
    %v582 = vld [vmem:[%s4 + $0xe0] sm:$0xff]
    %v583 = vld [vmem:[%s4 + $0xe8] sm:$0xff]
    %v584 = vld [vmem:[%s4 + $0xf0] sm:$0xff]
    %v585 = vld [vmem:[%s4 + $0xf8] sm:$0xff]
    %v587 = vlaneseq
    %v588 = vshrl.u32 %v587, 7
    %v589 = vsub.s32 0, %v588
    %v590 = vrot.slane %v550, %v589
    %v592 = vmul.f32 %v554, %v590
    %v593 = vmul.f32 %v555, %v590
    %v594 = vmul.f32 %v556, %v590
    %v595 = vmul.f32 %v557, %v590
    %v596 = vmul.f32 %v558, %v590
    %v597 = vmul.f32 %v559, %v590
    %v598 = vmul.f32 %v560, %v590
    %v599 = vmul.f32 %v561, %v590
    %v600 = vmul.f32 %v562, %v590
    %v601 = vmul.f32 %v563, %v590
    %v602 = vmul.f32 %v564, %v590
    %v603 = vmul.f32 %v565, %v590
    %v604 = vmul.f32 %v566, %v590
    %v605 = vmul.f32 %v567, %v590
    %v606 = vmul.f32 %v568, %v590
    %v607 = vmul.f32 %v569, %v590
    %v608 = vmul.f32 %v570, %v590
    %v609 = vmul.f32 %v571, %v590
    %v610 = vmul.f32 %v572, %v590
    %v611 = vmul.f32 %v573, %v590
    %v612 = vmul.f32 %v574, %v590
    %v613 = vmul.f32 %v575, %v590
    %v614 = vmul.f32 %v576, %v590
    %v615 = vmul.f32 %v577, %v590
    %v616 = vmul.f32 %v578, %v590
    %v617 = vmul.f32 %v579, %v590
    %v618 = vmul.f32 %v580, %v590
    %v619 = vmul.f32 %v581, %v590
    %v620 = vmul.f32 %v582, %v590
    %v621 = vmul.f32 %v583, %v590
    %v622 = vmul.f32 %v584, %v590
    %v623 = vmul.f32 %v585, %v590
    %v625 = vlaneseq
    %v626 = vshrl.u32 %v625, 7
    %v627 = vsub.s32 0, %v626
    %v628 = vrot.slane %v553, %v627
    %v630 = vadd.f32 %v592, %v628
    %v631 = vadd.f32 %v593, %v628
    %v632 = vadd.f32 %v594, %v628
    %v633 = vadd.f32 %v595, %v628
    %v634 = vadd.f32 %v596, %v628
    %v635 = vadd.f32 %v597, %v628
    %v636 = vadd.f32 %v598, %v628
    %v637 = vadd.f32 %v599, %v628
    %v638 = vadd.f32 %v600, %v628
    %v639 = vadd.f32 %v601, %v628
    %v640 = vadd.f32 %v602, %v628
    %v641 = vadd.f32 %v603, %v628
    %v642 = vadd.f32 %v604, %v628
    %v643 = vadd.f32 %v605, %v628
    %v644 = vadd.f32 %v606, %v628
    %v645 = vadd.f32 %v607, %v628
    %v646 = vadd.f32 %v608, %v628
    %v647 = vadd.f32 %v609, %v628
    %v648 = vadd.f32 %v610, %v628
    %v649 = vadd.f32 %v611, %v628
    %v650 = vadd.f32 %v612, %v628
    %v651 = vadd.f32 %v613, %v628
    %v652 = vadd.f32 %v614, %v628
    %v653 = vadd.f32 %v615, %v628
    %v654 = vadd.f32 %v616, %v628
    %v655 = vadd.f32 %v617, %v628
    %v656 = vadd.f32 %v618, %v628
    %v657 = vadd.f32 %v619, %v628
    %v658 = vadd.f32 %v620, %v628
    %v659 = vadd.f32 %v621, %v628
    %v660 = vadd.f32 %v622, %v628
    %v661 = vadd.f32 %v623, %v628
    %662 = vst [vmem:[%s4] sm:$0xff] %v630
    %663 = vst [vmem:[%s4 + $0x8] sm:$0xff] %v631
    %664 = vst [vmem:[%s4 + $0x10] sm:$0xff] %v632
    %665 = vst [vmem:[%s4 + $0x18] sm:$0xff] %v633
    %666 = vst [vmem:[%s4 + $0x20] sm:$0xff] %v634
    %667 = vst [vmem:[%s4 + $0x28] sm:$0xff] %v635
    %668 = vst [vmem:[%s4 + $0x30] sm:$0xff] %v636
    %669 = vst [vmem:[%s4 + $0x38] sm:$0xff] %v637
    %670 = vst [vmem:[%s4 + $0x40] sm:$0xff] %v638
    %671 = vst [vmem:[%s4 + $0x48] sm:$0xff] %v639
    %672 = vst [vmem:[%s4 + $0x50] sm:$0xff] %v640
    %673 = vst [vmem:[%s4 + $0x58] sm:$0xff] %v641
    %674 = vst [vmem:[%s4 + $0x60] sm:$0xff] %v642
    %675 = vst [vmem:[%s4 + $0x68] sm:$0xff] %v643
    %676 = vst [vmem:[%s4 + $0x70] sm:$0xff] %v644
    %677 = vst [vmem:[%s4 + $0x78] sm:$0xff] %v645
    %678 = vst [vmem:[%s4 + $0x80] sm:$0xff] %v646
    %679 = vst [vmem:[%s4 + $0x88] sm:$0xff] %v647
    %680 = vst [vmem:[%s4 + $0x90] sm:$0xff] %v648
    %681 = vst [vmem:[%s4 + $0x98] sm:$0xff] %v649
    %682 = vst [vmem:[%s4 + $0xa0] sm:$0xff] %v650
    %683 = vst [vmem:[%s4 + $0xa8] sm:$0xff] %v651
    %684 = vst [vmem:[%s4 + $0xb0] sm:$0xff] %v652
    %685 = vst [vmem:[%s4 + $0xb8] sm:$0xff] %v653
    %686 = vst [vmem:[%s4 + $0xc0] sm:$0xff] %v654
    %687 = vst [vmem:[%s4 + $0xc8] sm:$0xff] %v655
    %688 = vst [vmem:[%s4 + $0xd0] sm:$0xff] %v656
    %689 = vst [vmem:[%s4 + $0xd8] sm:$0xff] %v657
    %690 = vst [vmem:[%s4 + $0xe0] sm:$0xff] %v658
    %691 = vst [vmem:[%s4 + $0xe8] sm:$0xff] %v659
    %692 = vst [vmem:[%s4 + $0xf0] sm:$0xff] %v660
    %693 = vst [vmem:[%s4 + $0xf8] sm:$0xff] %v661
  $region25: #{tokenizer_forward.1} parent=0 // pred_fallthru
    _
  // Predicated region
  $region26: #{tokenizer_forward.1} parent=0 // pred_check
    _
  $region27: #{tokenizer_forward.1} parent=0 // pred_check_branch
    %695 = sbr.rel (0) target = $region29
  $region28: #{tokenizer_forward.1} parent=0 // pred_region
    _
  $region29: #{tokenizer_forward.1} parent=0 // pred_fallthru
    _
  // Predicated region
  $region30: #{tokenizer_forward.1} parent=0 // pred_check
    _
  $region31: #{tokenizer_forward.1} parent=0 // pred_check_branch
    %697 = sbr.rel (0) target = $region33
  $region32: #{tokenizer_forward.1} parent=0 // pred_region
    _
  $region33: #{tokenizer_forward.1} parent=0 // pred_fallthru
    _

</llo_original>
